<compile_context>
chip_gen: v5e
topology: v5e:2x2
jax: 0.10.0
libtpu: 0.0.40
codegen_flags: <defaults>
</compile_context>

<pallas_src>
import math

import jax
import jax.numpy as jnp
from jax.experimental import pallas as pl
from jax.experimental.pallas import tpu as pltpu


# ---------------------------------------------------------------------------
# Default path: one HBM->HBM DMA.  Zero VMEM pressure, zero grid-step cost.
# ---------------------------------------------------------------------------
def _dma_identity_kernel(x_hbm, o_hbm, sem):
    cp = pltpu.make_async_copy(x_hbm, o_hbm, sem)
    cp.start()
    cp.wait()


def _dma_passthrough(x: jax.Array) -> jax.Array:
    nbytes = x.size * jnp.dtype(x.dtype).itemsize
    return pl.pallas_call(
        _dma_identity_kernel,
        out_shape=jax.ShapeDtypeStruct(x.shape, x.dtype),
        in_specs=[pl.BlockSpec(memory_space=pl.ANY)],
        out_specs=pl.BlockSpec(memory_space=pl.ANY),
        scratch_shapes=[pltpu.SemaphoreType.DMA],
        cost_estimate=pl.CostEstimate(
            flops=0, transcendentals=0, bytes_accessed=2 * nbytes
        ),
    )(x)


# ---------------------------------------------------------------------------
# Scaffolding path: tiled, double-buffered VMEM pipeline.  This is where real
# per-tile compute (embedding lookup / conv / scoring) would slot in; for the
# current identity semantics it is strictly slower than the DMA path above,
# so it is opt-in.
# ---------------------------------------------------------------------------
_BLOCK_BYTES = 8 * 1024 * 1024  # ~8 MiB per block, constant across dtypes.


def _tiled_identity_kernel(x_ref, o_ref):
    # Real compute on the (row_tile, cols) VMEM tile goes here.
    o_ref[...] = x_ref[...]


def _sublane_pack(dtype):
    """Rows per vreg for this dtype; None for unsupported itemsizes."""
    return {4: 8, 2: 16, 1: 32}.get(jnp.dtype(dtype).itemsize)


def _tiled_passthrough(x: jax.Array):
    """Lane-dense tiled copy.  Returns None when the shape/dtype does not tile
    cleanly without padding (caller then uses the DMA path instead)."""
    total = math.prod(x.shape)
    itemsize = jnp.dtype(x.dtype).itemsize
    sub = _sublane_pack(x.dtype)
    if total == 0 or sub is None:
        return None

    # Lane (last) dim: widest multiple of 128 that divides the flat size.
    cols = None
    for c in (1024, 512, 256, 128):
        if total % c == 0:
            cols = c
            break
    if cols is None:
        return None  # ragged element count: no padding here, DMA path handles it.
    rows = total // cols

    # Row tile: constant ~_BLOCK_BYTES per block across dtypes, multiple of the
    # sublane pack, and an exact divisor of rows (no padding ever).
    if rows * cols * itemsize <= _BLOCK_BYTES:
        row_tile = rows  # single block == full array dims (always legal).
    elif rows % sub == 0:
        row_tile = sub
        r = (min(_BLOCK_BYTES // (cols * itemsize), rows) // sub) * sub
        while r >= sub:
            if rows % r == 0:
                row_tile = r
                break
            r -= sub
    else:
        return None

    grid_steps = rows // row_tile
    x2d = x.reshape(rows, cols)  # contiguous reshape: metadata-only, no HBM pass.

    out2d = pl.pallas_call(
        _tiled_identity_kernel,
        out_shape=jax.ShapeDtypeStruct((rows, cols), x.dtype),
        grid_spec=pltpu.PrefetchScalarGridSpec(
            num_scalar_prefetch=0,
            grid=(grid_steps,),
            in_specs=[pl.BlockSpec((row_tile, cols), lambda i: (i, 0))],
            out_specs=pl.BlockSpec((row_tile, cols), lambda i: (i, 0)),
        ),
        compiler_params=pltpu.CompilerParams(
            dimension_semantics=("parallel",),
            # 2 x double-buffered 8 MiB blocks = 32 MiB; give explicit headroom
            # (fits v7x's 64 MiB physical VMEM, trivially fits v5e/v6e).
            vmem_limit_bytes=40 * 1024 * 1024,
        ),
        cost_estimate=pl.CostEstimate(
            flops=0, transcendentals=0, bytes_accessed=2 * total * itemsize
        ),
    )(x2d)
    return out2d.reshape(x.shape)


# ---------------------------------------------------------------------------
# Public forward.
# ---------------------------------------------------------------------------
def dl_mention_detector_forward(x: jax.Array, *, use_tiled_scaffold: bool = False) -> jax.Array:
    """Pallas implementation of DLMentionDetector.forward (identity pass-through)."""
    if x.ndim == 0 or x.size == 0:
        return x
    if use_tiled_scaffold:
        out = _tiled_passthrough(x)
        if out is not None:
            return out
    return _dma_passthrough(x)


if __name__ == "__main__":
    key = jax.random.PRNGKey(0)
    # Small NCHW-style input consistent with a conv/embedding-based detector.
    x = jax.random.normal(key, (2, 4, 16, 16), dtype=jnp.float32)

    # Default path: single HBM->HBM DMA pass-through.
    y = jax.block_until_ready(dl_mention_detector_forward(x))
    assert y.shape == x.shape, (y.shape, x.shape)
    assert y.dtype == x.dtype, (y.dtype, x.dtype)
    assert bool(jnp.array_equal(y, x)), "DMA pass-through mismatch"

    # Scaffolding path: tiled lane-dense VMEM pipeline (future compute home).
    y2 = jax.block_until_ready(
        dl_mention_detector_forward(x, use_tiled_scaffold=True)
    )
    assert y2.shape == x.shape and y2.dtype == x.dtype
    assert bool(jnp.array_equal(y2, x)), "tiled pass-through mismatch"

    print("KERNEL_OK")
</pallas_src>

<mosaic_0001>
module attributes {stable_mosaic.version = 11 : i64} {
  func.func @_dma_identity_kernel(%arg0: memref<2x4x16x16xf32, #tpu.memory_space<any>>, %arg1: memref<2x4x16x16xf32, #tpu.memory_space<any>>, %arg2: memref<!tpu.dma_semaphore, #tpu.memory_space<semaphore_mem>>) attributes {dimension_semantics = [], scalar_prefetch = 0 : i64, scratch_operands = 1 : i64, tpu.core_type = #tpu.core_type<tc>} {
    tpu.enqueue_dma source(%arg0 : memref<2x4x16x16xf32, #tpu.memory_space<any>>) target(%arg1 : memref<2x4x16x16xf32, #tpu.memory_space<any>>) target_semaphore(%arg2 : memref<!tpu.dma_semaphore, #tpu.memory_space<semaphore_mem>>)
    tpu.wait_dma2 semaphore(%arg2 : memref<!tpu.dma_semaphore, #tpu.memory_space<semaphore_mem>>) src(%arg0 : memref<2x4x16x16xf32, #tpu.memory_space<any>>) dst(%arg1 : memref<2x4x16x16xf32, #tpu.memory_space<any>>)
    return
  }
}

</mosaic_0001>

<llo_original>
// kernel: tpu_custom_call.1
$region0: #{tpu_custom_call.1}
  #allocation0 [shape = 'u32[]', space=smem, size = 0x4, offset = 0x4, fixed_abs, tag = 'smem constant byte address 0x4 - core index']
  #allocation1 [shape = 'u32[72,128]{1,0:T(1,128)}', space=vmem, size = 0x9000, scoped, tag = 'internal scratch']
  #allocation2 [shape = 's32[1]{0}', space=sflag, size = 0x4, scoped, tag = 'scratch operand']
  #allocation3 [shape = 's32[]', space=sflag, size = 0x4, offset = 0, fixed_abs, tag = 'sflag constant byte address 0x0 - dummy sync flag']
  #allocation4 [shape = 'u32[0]{0}', space=smem, size = 0, offset = 0, fixed_abs, tag = 'smem constant byte address 0x0 - null']
  %s0 = inlined_call_operand.hbm [shape: f32[2,4,16,16], index: 0, kind: input, shape index: {}]
  %s1 = inlined_call_operand.hbm [shape: f32[2,4,16,16], index: 1, kind: output, shape index: {}]
  %s2 = sld [smem:[#allocation0]]
  $region2: #{tpu_custom_call.1} parent=0
    _
  %s4 = ssub.s32 1, %s2
  %s5 = scalar_select 0, %s4, %s2
  %s7 = sshll.u32 1, 14
  %s8 = sxor.u32 4294967295, %s7
  %s10 = sshll.u32 %s0, 4
  %s11 = int_to_ptr.hbm [resolvable:$true] %s10
  %s12 = sshll.u32 %s1, 4
  %s13 = int_to_ptr.hbm [resolvable:$true] %s12
  %16 = dma.general %s11, 2048, %s13, [#allocation2], [#allocation3], [#allocation4], 0, 0
  %s17 = smul.u32 2, 4
  %s18 = smul.u32 %s17, 16
  %s19 = smul.u32 %s18, 1
  %s20 = sshll.u32 %s19, 4
  %21 = dma.done [#allocation2], %s20
  %22 = vsyncmov [#allocation2]
  %s23 = vpop.sfrf %22
  %p24 = scmp.eq.s32.totalorder %s23, 0
  %p25 = pneg %p24
  %27 = shalt.err (%p25)

</llo_original>
